<compile_context>
chip_gen: v5e
topology: v5e:2x2
jax: 0.10.0
libtpu: 0.0.40
codegen_flags: <defaults>
</compile_context>

<pallas_src>
import numpy as np
import jax
import jax.numpy as jnp
from jax import lax
from jax.experimental import pallas as pl
from jax.experimental.pallas import tpu as pltpu


# ----------------------------------------------------------------------------
# kernel
# ----------------------------------------------------------------------------
def _posenc_kernel(pos_ref, freq_ref, o_ref):
    """Writes one (TR, CH) slab of the flattened (B*X, CH) positional table.

    pos_ref : (TR, 1)  f32  flat-row positions (row % X), precomputed host-side
    freq_ref: (1, CH)  f32  per-output-channel frequency inv_freq[c // 2]
    o_ref   : (TR, CH) out dtype
    """
    angle = pos_ref[...] * freq_ref[...]                        # (TR, CH)
    lane = lax.broadcasted_iota(jnp.int32, angle.shape, 1)      # channel index
    emb = jnp.where((lane & 1) == 0, jnp.sin(angle), jnp.cos(angle))
    o_ref[...] = emb.astype(o_ref.dtype)


# ----------------------------------------------------------------------------
# wrapper
# ----------------------------------------------------------------------------
def positional_encoding_1d(tensor, *, row_tile=512):
    """JAX/Pallas equivalent of PositionalEncoding1D(CH)(tensor)."""
    if tensor.ndim != 3:
        raise RuntimeError("The input tensor has to be 3d!")
    assert row_tile % 8 == 0
    B, X, orig_ch = tensor.shape
    channels = int(np.ceil(orig_ch / 2) * 2)          # padded (even) channel count

    # inv_freq exactly as the PyTorch buffer (float32 arithmetic).
    exponent = np.arange(0, channels, 2, dtype=np.float32) / np.float32(channels)
    inv_freq = np.float32(1.0) / np.power(np.float32(10000.0), exponent)

    # Per-output-channel frequency; interleaved sin/cos columns share
    # inv_freq[c // 2].  Slicing to orig_ch implements emb[..., :orig_ch].
    freq_row = jnp.asarray(inv_freq[np.arange(orig_ch) // 2][None, :])      # (1, CH)

    # Flat-row position column: row r of the (B*X, CH) slab has position r % X.
    rows = B * X
    pos_col = jnp.asarray(
        (np.arange(rows, dtype=np.int64) % X).astype(np.float32)[:, None])  # (rows, 1)

    tr = rows if rows <= row_tile else row_tile       # full-dim block or 8-aligned tile
    grid = (pl.cdiv(rows, tr),)

    out_flat = pl.pallas_call(
        _posenc_kernel,
        out_shape=jax.ShapeDtypeStruct((rows, orig_ch), tensor.dtype),
        grid=grid,
        in_specs=[
            pl.BlockSpec((tr, 1), lambda i: (i, 0)),          # positions: tiled
            pl.BlockSpec((1, orig_ch), lambda i: (0, 0)),     # freqs: resident
        ],
        out_specs=pl.BlockSpec((tr, orig_ch), lambda i: (i, 0)),
        compiler_params=pltpu.CompilerParams(dimension_semantics=("parallel",)),
    )(pos_col, freq_row)

    return out_flat.reshape(B, X, orig_ch)


# ----------------------------------------------------------------------------
# pure-numpy reference (mirrors the PyTorch forward) for validation
# ----------------------------------------------------------------------------
def _reference(B, X, orig_ch):
    channels = int(np.ceil(orig_ch / 2) * 2)
    exponent = np.arange(0, channels, 2, dtype=np.float32) / np.float32(channels)
    inv_freq = np.float32(1.0) / np.power(np.float32(10000.0), exponent)
    pos = np.arange(X, dtype=np.float32)
    sin_inp = np.einsum("i,j->ij", pos, inv_freq)                    # (X, channels/2)
    emb = np.stack((np.sin(sin_inp), np.cos(sin_inp)), axis=-1)      # interleave
    emb = emb.reshape(X, channels)
    return np.broadcast_to(emb[None, :, :orig_ch], (B, X, orig_ch))


if __name__ == "__main__":
    key = jax.random.PRNGKey(0)

    # primary small-shape test (batch=2, seq=16, channels=32)
    B, X, CH = 2, 16, 32
    x = jax.random.normal(key, (B, X, CH), jnp.float32)
    out = jax.block_until_ready(positional_encoding_1d(x))
    assert out.shape == (B, X, CH)
    np.testing.assert_allclose(np.asarray(out), _reference(B, X, CH),
                               rtol=1e-4, atol=1e-4)

    # odd-channel case exercises the ceil(ch/2)*2 padding + truncation path
    B2, X2, CH2 = 3, 8, 5
    x2 = jax.random.normal(jax.random.PRNGKey(1), (B2, X2, CH2), jnp.float32)
    out2 = jax.block_until_ready(positional_encoding_1d(x2))
    assert out2.shape == (B2, X2, CH2)
    np.testing.assert_allclose(np.asarray(out2), _reference(B2, X2, CH2),
                               rtol=1e-4, atol=1e-4)

    print("KERNEL_OK")
</pallas_src>

<mosaic_0001>
module attributes {stable_mosaic.version = 11 : i64} {
  func.func @_posenc_kernel(%arg0: i32, %arg1: memref<32x1xf32, #tpu.memory_space<vmem>>, %arg2: memref<1x32xf32, #tpu.memory_space<vmem>>, %arg3: memref<32x32xf32, #tpu.memory_space<vmem>>) attributes {dimension_semantics = [#tpu.dimension_semantics<parallel>], iteration_bounds = array<i64: 1>, scalar_prefetch = 0 : i64, scratch_operands = 0 : i64, tpu.core_type = #tpu.core_type<tc>, window_params = [{transform_indices = @transform_0, window_bounds = array<i64: 32, 1>}, {pipeline_mode = #tpu.pipeline_mode<synchronous>, transform_indices = @transform_1, window_bounds = array<i64: 1, 32>}, {transform_indices = @transform_2, window_bounds = array<i64: 32, 32>}]} {
    %c0 = arith.constant 0 : index
    %c0_0 = arith.constant 0 : index
    %0 = vector.load %arg1[%c0, %c0_0] : memref<32x1xf32, #tpu.memory_space<vmem>>, vector<32x1xf32>
    %c0_1 = arith.constant 0 : index
    %c0_2 = arith.constant 0 : index
    %1 = vector.load %arg2[%c0_1, %c0_2] : memref<1x32xf32, #tpu.memory_space<vmem>>, vector<1x32xf32>
    %2 = vector.broadcast %0 : vector<32x1xf32> to vector<32x32xf32>
    %3 = vector.broadcast %1 : vector<1x32xf32> to vector<32x32xf32>
    %4 = arith.mulf %2, %3 : vector<32x32xf32>
    %5 = tpu.iota {dimensions = array<i32: 1>} : vector<32x32xi32>
    %c1_i32 = arith.constant 1 : i32
    %6 = vector.broadcast %c1_i32 : i32 to vector<32x32xi32>
    %7 = arith.andi %5, %6 : vector<32x32xi32>
    %c0_i32 = arith.constant 0 : i32
    %8 = vector.broadcast %c0_i32 : i32 to vector<32x32xi32>
    %9 = arith.cmpi eq, %7, %8 : vector<32x32xi32>
    %10 = math.sin %4 : vector<32x32xf32>
    %11 = math.cos %4 : vector<32x32xf32>
    %12 = arith.select %9, %10, %11 : vector<32x32xi1>, vector<32x32xf32>
    %c0_3 = arith.constant 0 : index
    %c0_4 = arith.constant 0 : index
    %13 = vector.load %arg3[%c0_3, %c0_4] : memref<32x32xf32, #tpu.memory_space<vmem>>, vector<32x32xf32>
    tpu.vector_store %arg3[%c0_3, %c0_4], %12 {strides = array<i32>} : memref<32x32xf32, #tpu.memory_space<vmem>>, vector<32x32xf32>,
    return
  }
  func.func @transform_0(%arg0: i32) -> (i32, i32) {
    %c0_i32 = arith.constant 0 : i32
    %c0_i32_0 = arith.constant 0 : i32
    return %arg0, %c0_i32 : i32, i32
  }
  func.func @transform_1(%arg0: i32) -> (i32, i32) {
    %c0_i32 = arith.constant 0 : i32
    %c0_i32_0 = arith.constant 0 : i32
    %c0_i32_1 = arith.constant 0 : i32
    return %c0_i32, %c0_i32_0 : i32, i32
  }
  func.func @transform_2(%arg0: i32) -> (i32, i32) {
    %c0_i32 = arith.constant 0 : i32
    %c0_i32_0 = arith.constant 0 : i32
    return %arg0, %c0_i32 : i32, i32
  }
}

</mosaic_0001>

<llo_original>
// kernel: tpu_custom_call.1
$region0: #{tpu_custom_call.1}
  #allocation0 [shape = 'u32[]', space=smem, size = 0x4, offset = 0x4, fixed_abs, tag = 'smem constant byte address 0x4 - core index']
  #allocation1 [shape = 'u32[72,128]{1,0:T(1,128)}', space=vmem, size = 0x9000, scoped, tag = 'internal scratch']
  %s0 = inlined_call_operand.vmem [shape: f32[32,1], index: 0, kind: input, shape index: {}]
  %s1 = inlined_call_operand.vmem [shape: f32[1,32], index: 1, kind: input, shape index: {}]
  %s2 = inlined_call_operand.hbm [shape: f32[32,32], index: 2, kind: output, shape index: {}]
  %s3 = sld [smem:[#allocation0]]
  $region18: #{tpu_custom_call.1} parent=0
    _
  %s5 = ssub.s32 1, %s3
  %s6 = scalar_select 0, %s5, %s3
  $region1: #{tpu_custom_call.1} parent=0
    #allocation2 [shape = 'u8[16384]{0}', space=vmem, size = 0x4000, scoped, tag = 'output window, operand 0, single buffered']
    #allocation3 [shape = 's32[1]{0}', space=sflag, size = 0x4, scoped, tag = 'scoped memory for tpu_custom_call.1']
    %7 = vsyncpa [#allocation3], 0
    // Predicated region
    $region2: #{tpu_custom_call.1} parent=1 // pred_check
      _
    $region3: #{tpu_custom_call.1} parent=1 // pred_check_branch
      %9 = sbr.rel (0) target = $region5
    $region4: #{tpu_custom_call.1} parent=1 // pred_region
      _
    $region5: #{tpu_custom_call.1} parent=1 // pred_fallthru
      _
    // Predicated region
    $region6: #{tpu_custom_call.1} parent=1 // pred_check
      _
    $region7: #{tpu_custom_call.1} parent=1 // pred_check_branch
      %11 = sbr.rel (0) target = $region9
    $region8: #{tpu_custom_call.1} parent=1 // pred_region
      _
    $region9: #{tpu_custom_call.1} parent=1 // pred_fallthru
      _
    %v12 = vld [vmem:[%s0] sm:$0xff]
    %v13 = vld [vmem:[%s0 + $0x8] sm:$0xff]
    %v14 = vld [vmem:[%s0 + $0x10] sm:$0xff]
    %v15 = vld [vmem:[%s0 + $0x18] sm:$0xff]
    %v16 = vld [vmem:[%s1] sm:$0x1]
    %18 = vset.pattern.permute.xlu0 0
    %19 = vperm.xlu0 %18, %v12
    %v20 = vpop.permute.xlu0 %19
    %23 = vset.pattern.permute.xlu0 0
    %24 = vperm.xlu0 %23, %v13
    %v25 = vpop.permute.xlu0 %24
    %28 = vset.pattern.permute.xlu0 0
    %29 = vperm.xlu0 %28, %v14
    %v30 = vpop.permute.xlu0 %29
    %33 = vset.pattern.permute.xlu0 0
    %34 = vperm.xlu0 %33, %v15
    %v35 = vpop.permute.xlu0 %34
    %v38 = vperm.slane %v16, 0
    %v40 = vmul.f32 %v20, %v38
    %v41 = vmul.f32 %v25, %v38
    %v42 = vmul.f32 %v30, %v38
    %v43 = vmul.f32 %v35, %v38
    %v44 = vlaneseq
    %v45 = vand.u32 %v44, 127
    %v46 = vand.u32 %v45, 1
    %vm47 = vcmp.eq.s32.totalorder %v46, 0
    %v48 = vand.u32 2147483647, %v40
    %vm49 = vcmp.le.f32.partialorder %v48, 0.7853982
    %vm50 = vcmp.lt.s32.totalorder %v40, 0
    %v51 = vand.u32 %v40, 2139095040
    %v52 = vshrl.u32 %v51, 23
    %v53 = vsub.s32 %v52, 127
    %v54 = vand.u32 2147483647, %v40
    %v55 = vand.u32 %v54, 8388607
    %v56 = vor.u32 %v55, 8388608
    %v57 = vsub.s32 0, %v56
    %v58 = vadd.s32 %v53, 1
    %vm59 = vcmp.gt.s32.totalorder %v58, 0
    %v60 = vsel %vm59, %v58, 0
    %v61 = vshrl.u32 %v60, 5
    %v62 = vand.u32 %v60, 31
    %v63 = vsub.s32 32, %v62
    %v64 = vshrl.u32 683565275, %v63
    %v65 = vshll.u32 683565275, %v62
    %v66 = vshrl.u32 2475754826, %v63
    %v67 = vor.u32 %v65, %v66
    %v68 = vshll.u32 2475754826, %v62
    %v69 = vshrl.u32 2131351028, %v63
    %v70 = vor.u32 %v68, %v69
    %v71 = vshll.u32 2131351028, %v62
    %v72 = vshrl.u32 2102212464, %v63
    %v73 = vor.u32 %v71, %v72
    %v74 = vshll.u32 2102212464, %v62
    %v75 = vshrl.u32 920167782, %v63
    %v76 = vor.u32 %v74, %v75
    %v77 = vshll.u32 920167782, %v62
    %v78 = vshrl.u32 1326507024, %v63
    %v79 = vor.u32 %v77, %v78
    %vm80 = vcmp.lt.s32.totalorder %v61, 1
    %vm81 = vcmp.lt.s32.totalorder %v61, 2
    %vm82 = vcmp.lt.s32.totalorder %v61, 3
    %vm83 = vcmp.lt.s32.totalorder %v61, 4
    %v84 = vsel %vm80, %v64, %v67
    %v85 = vsel %vm83, %v73, 2102212464
    %v86 = vsel %vm82, %v70, %v85
    %v87 = vsel %vm81, %v84, %v86
    %v88 = vsel %vm80, %v67, %v70
    %v89 = vsel %vm83, %v76, 920167782
    %v90 = vsel %vm82, %v73, %v89
    %v91 = vsel %vm81, %v88, %v90
    %v92 = vsel %vm80, %v70, %v73
    %v93 = vsel %vm83, %v79, 1326507024
    %v94 = vsel %vm82, %v76, %v93
    %v95 = vsel %vm81, %v92, %v94
    %v96 = vshll.u32 %v56, 8
    %v97 = vand.u32 %v96, 65535
    %v98 = vshrl.u32 %v96, 16
    %v99 = vand.u32 %v95, 65535
    %v100 = vshrl.u32 %v95, 16
    %v101 = vmul.u32 %v97, %v99
    %v102 = vmul.u32 %v97, %v100
    %v103 = vmul.u32 %v98, %v99
    %v104 = vmul.u32 %v98, %v100
    %v105 = vshll.u32 %v102, 16
    %v106 = vshrl.u32 %v102, 16
    %v107 = vshll.u32 %v103, 16
    %v108 = vshrl.u32 %v103, 16
    %vm109 = vc.u32 %v101, %v105
    %v110 = vsel %vm109, 1, 0
    %v111 = vadd.s32 %v101, %v105
    %v112 = vadd.s32 %v104, %v110
    %vm113 = vc.u32 %v111, %v107
    %v114 = vsel %vm113, 1, 0
    %v115 = vadd.s32 %v111, %v107
    %v116 = vadd.s32 %v112, %v114
    %v117 = vadd.s32 %v116, %v106
    %v118 = vadd.s32 %v117, %v108
    %v119 = vand.u32 %v96, 65535
    %v120 = vshrl.u32 %v96, 16
    %v121 = vand.u32 %v91, 65535
    %v122 = vshrl.u32 %v91, 16
    %v123 = vmul.u32 %v119, %v121
    %v124 = vmul.u32 %v119, %v122
    %v125 = vmul.u32 %v120, %v121
    %v126 = vmul.u32 %v120, %v122
    %v127 = vshll.u32 %v124, 16
    %v128 = vshrl.u32 %v124, 16
    %v129 = vshll.u32 %v125, 16
    %v130 = vshrl.u32 %v125, 16
    %vm131 = vc.u32 %v123, %v127
    %v132 = vsel %vm131, 1, 0
    %v133 = vadd.s32 %v123, %v127
    %v134 = vadd.s32 %v126, %v132
    %vm135 = vc.u32 %v133, %v129
    %v136 = vsel %vm135, 1, 0
    %v137 = vadd.s32 %v133, %v129
    %v138 = vadd.s32 %v134, %v136
    %v139 = vadd.s32 %v138, %v128
    %v140 = vadd.s32 %v139, %v130
    %v141 = vmul.u32 %v96, %v87
    %v142 = vadd.s32 %v118, %v137
    %vm143 = vc.u32 %v118, %v137
    %v144 = vadd.s32 %v140, 1
    %v145 = vsel %vm143, %v144, %v140
    %v146 = vadd.s32 %v141, %v145
    %v147 = vadd.s32 %v146, 536870912
    %v148 = vshrl.u32 %v147, 30
    %v149 = vshll.u32 %v148, 30
    %v150 = vsub.s32 %v146, %v149
    %vm151 = vcmp.lt.s32.totalorder %v150, 0
    %v152 = vsub.s32 0, %v150
    %v153 = vsel %vm151, %v152, %v150
    %v154 = vclz %v153
    %v155 = vsub.s32 %v154, 2
    %vm156 = vcmp.gt.s32.totalorder 0, %v155
    %v157 = vsel %vm156, 0, %v155
    %v158 = vsub.s32 32, %v157
    %v159 = vshll.u32 %v150, %v157
    %v160 = vshrl.u32 %v142, %v158
    %v161 = vor.u32 %v159, %v160
    %v162 = vsub.s32 4294967266, %v157
    %v163 = vadd.s32 %v162, 127
    %v164 = vshll.u32 %v163, 23
    %v165 = vor.u32 4788187, %v164
    %v166 = vand.u32 2147483647, %v165
    %v168 = vcvt.s32.f32 %v161
    %v169 = vmul.f32 %v168, %v166
    %v170 = vxor.u32 %v169, 2147483648
    %v171 = vsel %vm50, %v170, %v169
    %v172 = vsub.s32 4, %v148
    %v173 = vsel %vm50, %v172, %v148
    %v174 = vsel %vm49, %v40, %v171
    %v175 = vsel %vm49, 0, %v173
    %v176 = vmul.f32 %v174, %v174
    %v177 = vmul.f32 %v176, -0.001358992
    %v178 = vadd.f32 %v177, 0.041655596
    %v179 = vmul.f32 %v176, %v178
    %v180 = vadd.f32 %v179, -0.4999988
    %v181 = vmul.f32 %v176, %v180
    %v182 = vadd.f32 1.0, %v181
    %v183 = vmul.f32 %v174, %v174
    %v184 = vmul.f32 %v183, -0.00019511016
    %v185 = vadd.f32 %v184, 0.008332121
    %v186 = vmul.f32 %v183, %v185
    %v187 = vadd.f32 %v186, -0.16666654
    %v188 = vmul.f32 %v183, %v187
    %v189 = vadd.f32 %v188, 1.0
    %v190 = vmul.f32 %v189, %v174
    %vm191 = vweird.f32 %v40
    %v192 = vadd.s32 %v175, 3
    %v193 = vand.u32 %v192, 3
    %vm194 = vcmp.lt.s32.totalorder %v193, 2
    %vm195 = vcmp.eq.s32.totalorder %v193, 0
    %v196 = vxor.u32 %v190, 2147483648
    %v197 = vsel %vm195, %v182, %v196
    %vm198 = vcmp.eq.s32.totalorder %v193, 2
    %v199 = vxor.u32 %v182, 2147483648
    %v200 = vsel %vm198, %v199, %v190
    %v201 = vsel %vm194, %v197, %v200
    %v202 = vsel %vm191, nan, %v201
    %v203 = vand.u32 2147483647, %v41
    %vm204 = vcmp.le.f32.partialorder %v203, 0.7853982
    %vm205 = vcmp.lt.s32.totalorder %v41, 0
    %v206 = vand.u32 %v41, 2139095040
    %v207 = vshrl.u32 %v206, 23
    %v208 = vsub.s32 %v207, 127
    %v209 = vand.u32 2147483647, %v41
    %v210 = vand.u32 %v209, 8388607
    %v211 = vor.u32 %v210, 8388608
    %v212 = vsub.s32 0, %v211
    %v213 = vadd.s32 %v208, 1
    %vm214 = vcmp.gt.s32.totalorder %v213, 0
    %v215 = vsel %vm214, %v213, 0
    %v216 = vshrl.u32 %v215, 5
    %v217 = vand.u32 %v215, 31
    %v218 = vsub.s32 32, %v217
    %v219 = vshrl.u32 683565275, %v218
    %v220 = vshll.u32 683565275, %v217
    %v221 = vshrl.u32 2475754826, %v218
    %v222 = vor.u32 %v220, %v221
    %v223 = vshll.u32 2475754826, %v217
    %v224 = vshrl.u32 2131351028, %v218
    %v225 = vor.u32 %v223, %v224
    %v226 = vshll.u32 2131351028, %v217
    %v227 = vshrl.u32 2102212464, %v218
    %v228 = vor.u32 %v226, %v227
    %v229 = vshll.u32 2102212464, %v217
    %v230 = vshrl.u32 920167782, %v218
    %v231 = vor.u32 %v229, %v230
    %v232 = vshll.u32 920167782, %v217
    %v233 = vshrl.u32 1326507024, %v218
    %v234 = vor.u32 %v232, %v233
    %vm235 = vcmp.lt.s32.totalorder %v216, 1
    %vm236 = vcmp.lt.s32.totalorder %v216, 2
    %vm237 = vcmp.lt.s32.totalorder %v216, 3
    %vm238 = vcmp.lt.s32.totalorder %v216, 4
    %v239 = vsel %vm235, %v219, %v222
    %v240 = vsel %vm238, %v228, 2102212464
    %v241 = vsel %vm237, %v225, %v240
    %v242 = vsel %vm236, %v239, %v241
    %v243 = vsel %vm235, %v222, %v225
    %v244 = vsel %vm238, %v231, 920167782
    %v245 = vsel %vm237, %v228, %v244
    %v246 = vsel %vm236, %v243, %v245
    %v247 = vsel %vm235, %v225, %v228
    %v248 = vsel %vm238, %v234, 1326507024
    %v249 = vsel %vm237, %v231, %v248
    %v250 = vsel %vm236, %v247, %v249
    %v251 = vshll.u32 %v211, 8
    %v252 = vand.u32 %v251, 65535
    %v253 = vshrl.u32 %v251, 16
    %v254 = vand.u32 %v250, 65535
    %v255 = vshrl.u32 %v250, 16
    %v256 = vmul.u32 %v252, %v254
    %v257 = vmul.u32 %v252, %v255
    %v258 = vmul.u32 %v253, %v254
    %v259 = vmul.u32 %v253, %v255
    %v260 = vshll.u32 %v257, 16
    %v261 = vshrl.u32 %v257, 16
    %v262 = vshll.u32 %v258, 16
    %v263 = vshrl.u32 %v258, 16
    %vm264 = vc.u32 %v256, %v260
    %v265 = vsel %vm264, 1, 0
    %v266 = vadd.s32 %v256, %v260
    %v267 = vadd.s32 %v259, %v265
    %vm268 = vc.u32 %v266, %v262
    %v269 = vsel %vm268, 1, 0
    %v270 = vadd.s32 %v266, %v262
    %v271 = vadd.s32 %v267, %v269
    %v272 = vadd.s32 %v271, %v261
    %v273 = vadd.s32 %v272, %v263
    %v274 = vand.u32 %v251, 65535
    %v275 = vshrl.u32 %v251, 16
    %v276 = vand.u32 %v246, 65535
    %v277 = vshrl.u32 %v246, 16
    %v278 = vmul.u32 %v274, %v276
    %v279 = vmul.u32 %v274, %v277
    %v280 = vmul.u32 %v275, %v276
    %v281 = vmul.u32 %v275, %v277
    %v282 = vshll.u32 %v279, 16
    %v283 = vshrl.u32 %v279, 16
    %v284 = vshll.u32 %v280, 16
    %v285 = vshrl.u32 %v280, 16
    %vm286 = vc.u32 %v278, %v282
    %v287 = vsel %vm286, 1, 0
    %v288 = vadd.s32 %v278, %v282
    %v289 = vadd.s32 %v281, %v287
    %vm290 = vc.u32 %v288, %v284
    %v291 = vsel %vm290, 1, 0
    %v292 = vadd.s32 %v288, %v284
    %v293 = vadd.s32 %v289, %v291
    %v294 = vadd.s32 %v293, %v283
    %v295 = vadd.s32 %v294, %v285
    %v296 = vmul.u32 %v251, %v242
    %v297 = vadd.s32 %v273, %v292
    %vm298 = vc.u32 %v273, %v292
    %v299 = vadd.s32 %v295, 1
    %v300 = vsel %vm298, %v299, %v295
    %v301 = vadd.s32 %v296, %v300
    %v302 = vadd.s32 %v301, 536870912
    %v303 = vshrl.u32 %v302, 30
    %v304 = vshll.u32 %v303, 30
    %v305 = vsub.s32 %v301, %v304
    %vm306 = vcmp.lt.s32.totalorder %v305, 0
    %v307 = vsub.s32 0, %v305
    %v308 = vsel %vm306, %v307, %v305
    %v309 = vclz %v308
    %v310 = vsub.s32 %v309, 2
    %vm311 = vcmp.gt.s32.totalorder 0, %v310
    %v312 = vsel %vm311, 0, %v310
    %v313 = vsub.s32 32, %v312
    %v314 = vshll.u32 %v305, %v312
    %v315 = vshrl.u32 %v297, %v313
    %v316 = vor.u32 %v314, %v315
    %v317 = vsub.s32 4294967266, %v312
    %v318 = vadd.s32 %v317, 127
    %v319 = vshll.u32 %v318, 23
    %v320 = vor.u32 4788187, %v319
    %v321 = vand.u32 2147483647, %v320
    %v323 = vcvt.s32.f32 %v316
    %v324 = vmul.f32 %v323, %v321
    %v325 = vxor.u32 %v324, 2147483648
    %v326 = vsel %vm205, %v325, %v324
    %v327 = vsub.s32 4, %v303
    %v328 = vsel %vm205, %v327, %v303
    %v329 = vsel %vm204, %v41, %v326
    %v330 = vsel %vm204, 0, %v328
    %v331 = vmul.f32 %v329, %v329
    %v332 = vmul.f32 %v331, -0.001358992
    %v333 = vadd.f32 %v332, 0.041655596
    %v334 = vmul.f32 %v331, %v333
    %v335 = vadd.f32 %v334, -0.4999988
    %v336 = vmul.f32 %v331, %v335
    %v337 = vadd.f32 1.0, %v336
    %v338 = vmul.f32 %v329, %v329
    %v339 = vmul.f32 %v338, -0.00019511016
    %v340 = vadd.f32 %v339, 0.008332121
    %v341 = vmul.f32 %v338, %v340
    %v342 = vadd.f32 %v341, -0.16666654
    %v343 = vmul.f32 %v338, %v342
    %v344 = vadd.f32 %v343, 1.0
    %v345 = vmul.f32 %v344, %v329
    %vm346 = vweird.f32 %v41
    %v347 = vadd.s32 %v330, 3
    %v348 = vand.u32 %v347, 3
    %vm349 = vcmp.lt.s32.totalorder %v348, 2
    %vm350 = vcmp.eq.s32.totalorder %v348, 0
    %v351 = vxor.u32 %v345, 2147483648
    %v352 = vsel %vm350, %v337, %v351
    %vm353 = vcmp.eq.s32.totalorder %v348, 2
    %v354 = vxor.u32 %v337, 2147483648
    %v355 = vsel %vm353, %v354, %v345
    %v356 = vsel %vm349, %v352, %v355
    %v357 = vsel %vm346, nan, %v356
    %v358 = vand.u32 2147483647, %v42
    %vm359 = vcmp.le.f32.partialorder %v358, 0.7853982
    %vm360 = vcmp.lt.s32.totalorder %v42, 0
    %v361 = vand.u32 %v42, 2139095040
    %v362 = vshrl.u32 %v361, 23
    %v363 = vsub.s32 %v362, 127
    %v364 = vand.u32 2147483647, %v42
    %v365 = vand.u32 %v364, 8388607
    %v366 = vor.u32 %v365, 8388608
    %v367 = vsub.s32 0, %v366
    %v368 = vadd.s32 %v363, 1
    %vm369 = vcmp.gt.s32.totalorder %v368, 0
    %v370 = vsel %vm369, %v368, 0
    %v371 = vshrl.u32 %v370, 5
    %v372 = vand.u32 %v370, 31
    %v373 = vsub.s32 32, %v372
    %v374 = vshrl.u32 683565275, %v373
    %v375 = vshll.u32 683565275, %v372
    %v376 = vshrl.u32 2475754826, %v373
    %v377 = vor.u32 %v375, %v376
    %v378 = vshll.u32 2475754826, %v372
    %v379 = vshrl.u32 2131351028, %v373
    %v380 = vor.u32 %v378, %v379
    %v381 = vshll.u32 2131351028, %v372
    %v382 = vshrl.u32 2102212464, %v373
    %v383 = vor.u32 %v381, %v382
    %v384 = vshll.u32 2102212464, %v372
    %v385 = vshrl.u32 920167782, %v373
    %v386 = vor.u32 %v384, %v385
    %v387 = vshll.u32 920167782, %v372
    %v388 = vshrl.u32 1326507024, %v373
    %v389 = vor.u32 %v387, %v388
    %vm390 = vcmp.lt.s32.totalorder %v371, 1
    %vm391 = vcmp.lt.s32.totalorder %v371, 2
    %vm392 = vcmp.lt.s32.totalorder %v371, 3
    %vm393 = vcmp.lt.s32.totalorder %v371, 4
    %v394 = vsel %vm390, %v374, %v377
    %v395 = vsel %vm393, %v383, 2102212464
    %v396 = vsel %vm392, %v380, %v395
    %v397 = vsel %vm391, %v394, %v396
    %v398 = vsel %vm390, %v377, %v380
    %v399 = vsel %vm393, %v386, 920167782
    %v400 = vsel %vm392, %v383, %v399
    %v401 = vsel %vm391, %v398, %v400
    %v402 = vsel %vm390, %v380, %v383
    %v403 = vsel %vm393, %v389, 1326507024
    %v404 = vsel %vm392, %v386, %v403
    %v405 = vsel %vm391, %v402, %v404
    %v406 = vshll.u32 %v366, 8
    %v407 = vand.u32 %v406, 65535
    %v408 = vshrl.u32 %v406, 16
    %v409 = vand.u32 %v405, 65535
    %v410 = vshrl.u32 %v405, 16
    %v411 = vmul.u32 %v407, %v409
    %v412 = vmul.u32 %v407, %v410
    %v413 = vmul.u32 %v408, %v409
    %v414 = vmul.u32 %v408, %v410
    %v415 = vshll.u32 %v412, 16
    %v416 = vshrl.u32 %v412, 16
    %v417 = vshll.u32 %v413, 16
    %v418 = vshrl.u32 %v413, 16
    %vm419 = vc.u32 %v411, %v415
    %v420 = vsel %vm419, 1, 0
    %v421 = vadd.s32 %v411, %v415
    %v422 = vadd.s32 %v414, %v420
    %vm423 = vc.u32 %v421, %v417
    %v424 = vsel %vm423, 1, 0
    %v425 = vadd.s32 %v421, %v417
    %v426 = vadd.s32 %v422, %v424
    %v427 = vadd.s32 %v426, %v416
    %v428 = vadd.s32 %v427, %v418
    %v429 = vand.u32 %v406, 65535
    %v430 = vshrl.u32 %v406, 16
    %v431 = vand.u32 %v401, 65535
    %v432 = vshrl.u32 %v401, 16
    %v433 = vmul.u32 %v429, %v431
    %v434 = vmul.u32 %v429, %v432
    %v435 = vmul.u32 %v430, %v431
    %v436 = vmul.u32 %v430, %v432
    %v437 = vshll.u32 %v434, 16
    %v438 = vshrl.u32 %v434, 16
    %v439 = vshll.u32 %v435, 16
    %v440 = vshrl.u32 %v435, 16
    %vm441 = vc.u32 %v433, %v437
    %v442 = vsel %vm441, 1, 0
    %v443 = vadd.s32 %v433, %v437
    %v444 = vadd.s32 %v436, %v442
    %vm445 = vc.u32 %v443, %v439
    %v446 = vsel %vm445, 1, 0
    %v447 = vadd.s32 %v443, %v439
    %v448 = vadd.s32 %v444, %v446
    %v449 = vadd.s32 %v448, %v438
    %v450 = vadd.s32 %v449, %v440
    %v451 = vmul.u32 %v406, %v397
    %v452 = vadd.s32 %v428, %v447
    %vm453 = vc.u32 %v428, %v447
    %v454 = vadd.s32 %v450, 1
    %v455 = vsel %vm453, %v454, %v450
    %v456 = vadd.s32 %v451, %v455
    %v457 = vadd.s32 %v456, 536870912
    %v458 = vshrl.u32 %v457, 30
    %v459 = vshll.u32 %v458, 30
    %v460 = vsub.s32 %v456, %v459
    %vm461 = vcmp.lt.s32.totalorder %v460, 0
    %v462 = vsub.s32 0, %v460
    %v463 = vsel %vm461, %v462, %v460
    %v464 = vclz %v463
    %v465 = vsub.s32 %v464, 2
    %vm466 = vcmp.gt.s32.totalorder 0, %v465
    %v467 = vsel %vm466, 0, %v465
    %v468 = vsub.s32 32, %v467
    %v469 = vshll.u32 %v460, %v467
    %v470 = vshrl.u32 %v452, %v468
    %v471 = vor.u32 %v469, %v470
    %v472 = vsub.s32 4294967266, %v467
    %v473 = vadd.s32 %v472, 127
    %v474 = vshll.u32 %v473, 23
    %v475 = vor.u32 4788187, %v474
    %v476 = vand.u32 2147483647, %v475
    %v478 = vcvt.s32.f32 %v471
    %v479 = vmul.f32 %v478, %v476
    %v480 = vxor.u32 %v479, 2147483648
    %v481 = vsel %vm360, %v480, %v479
    %v482 = vsub.s32 4, %v458
    %v483 = vsel %vm360, %v482, %v458
    %v484 = vsel %vm359, %v42, %v481
    %v485 = vsel %vm359, 0, %v483
    %v486 = vmul.f32 %v484, %v484
    %v487 = vmul.f32 %v486, -0.001358992
    %v488 = vadd.f32 %v487, 0.041655596
    %v489 = vmul.f32 %v486, %v488
    %v490 = vadd.f32 %v489, -0.4999988
    %v491 = vmul.f32 %v486, %v490
    %v492 = vadd.f32 1.0, %v491
    %v493 = vmul.f32 %v484, %v484
    %v494 = vmul.f32 %v493, -0.00019511016
    %v495 = vadd.f32 %v494, 0.008332121
    %v496 = vmul.f32 %v493, %v495
    %v497 = vadd.f32 %v496, -0.16666654
    %v498 = vmul.f32 %v493, %v497
    %v499 = vadd.f32 %v498, 1.0
    %v500 = vmul.f32 %v499, %v484
    %vm501 = vweird.f32 %v42
    %v502 = vadd.s32 %v485, 3
    %v503 = vand.u32 %v502, 3
    %vm504 = vcmp.lt.s32.totalorder %v503, 2
    %vm505 = vcmp.eq.s32.totalorder %v503, 0
    %v506 = vxor.u32 %v500, 2147483648
    %v507 = vsel %vm505, %v492, %v506
    %vm508 = vcmp.eq.s32.totalorder %v503, 2
    %v509 = vxor.u32 %v492, 2147483648
    %v510 = vsel %vm508, %v509, %v500
    %v511 = vsel %vm504, %v507, %v510
    %v512 = vsel %vm501, nan, %v511
    %v513 = vand.u32 2147483647, %v43
    %vm514 = vcmp.le.f32.partialorder %v513, 0.7853982
    %vm515 = vcmp.lt.s32.totalorder %v43, 0
    %v516 = vand.u32 %v43, 2139095040
    %v517 = vshrl.u32 %v516, 23
    %v518 = vsub.s32 %v517, 127
    %v519 = vand.u32 2147483647, %v43
    %v520 = vand.u32 %v519, 8388607
    %v521 = vor.u32 %v520, 8388608
    %v522 = vsub.s32 0, %v521
    %v523 = vadd.s32 %v518, 1
    %vm524 = vcmp.gt.s32.totalorder %v523, 0
    %v525 = vsel %vm524, %v523, 0
    %v526 = vshrl.u32 %v525, 5
    %v527 = vand.u32 %v525, 31
    %v528 = vsub.s32 32, %v527
    %v529 = vshrl.u32 683565275, %v528
    %v530 = vshll.u32 683565275, %v527
    %v531 = vshrl.u32 2475754826, %v528
    %v532 = vor.u32 %v530, %v531
    %v533 = vshll.u32 2475754826, %v527
    %v534 = vshrl.u32 2131351028, %v528
    %v535 = vor.u32 %v533, %v534
    %v536 = vshll.u32 2131351028, %v527
    %v537 = vshrl.u32 2102212464, %v528
    %v538 = vor.u32 %v536, %v537
    %v539 = vshll.u32 2102212464, %v527
    %v540 = vshrl.u32 920167782, %v528
    %v541 = vor.u32 %v539, %v540
    %v542 = vshll.u32 920167782, %v527
    %v543 = vshrl.u32 1326507024, %v528
    %v544 = vor.u32 %v542, %v543
    %vm545 = vcmp.lt.s32.totalorder %v526, 1
    %vm546 = vcmp.lt.s32.totalorder %v526, 2
    %vm547 = vcmp.lt.s32.totalorder %v526, 3
    %vm548 = vcmp.lt.s32.totalorder %v526, 4
    %v549 = vsel %vm545, %v529, %v532
    %v550 = vsel %vm548, %v538, 2102212464
    %v551 = vsel %vm547, %v535, %v550
    %v552 = vsel %vm546, %v549, %v551
    %v553 = vsel %vm545, %v532, %v535
    %v554 = vsel %vm548, %v541, 920167782
    %v555 = vsel %vm547, %v538, %v554
    %v556 = vsel %vm546, %v553, %v555
    %v557 = vsel %vm545, %v535, %v538
    %v558 = vsel %vm548, %v544, 1326507024
    %v559 = vsel %vm547, %v541, %v558
    %v560 = vsel %vm546, %v557, %v559
    %v561 = vshll.u32 %v521, 8
    %v562 = vand.u32 %v561, 65535
    %v563 = vshrl.u32 %v561, 16
    %v564 = vand.u32 %v560, 65535
    %v565 = vshrl.u32 %v560, 16
    %v566 = vmul.u32 %v562, %v564
    %v567 = vmul.u32 %v562, %v565
    %v568 = vmul.u32 %v563, %v564
    %v569 = vmul.u32 %v563, %v565
    %v570 = vshll.u32 %v567, 16
    %v571 = vshrl.u32 %v567, 16
    %v572 = vshll.u32 %v568, 16
    %v573 = vshrl.u32 %v568, 16
    %vm574 = vc.u32 %v566, %v570
    %v575 = vsel %vm574, 1, 0
    %v576 = vadd.s32 %v566, %v570
    %v577 = vadd.s32 %v569, %v575
    %vm578 = vc.u32 %v576, %v572
    %v579 = vsel %vm578, 1, 0
    %v580 = vadd.s32 %v576, %v572
    %v581 = vadd.s32 %v577, %v579
    %v582 = vadd.s32 %v581, %v571
    %v583 = vadd.s32 %v582, %v573
    %v584 = vand.u32 %v561, 65535
    %v585 = vshrl.u32 %v561, 16
    %v586 = vand.u32 %v556, 65535
    %v587 = vshrl.u32 %v556, 16
    %v588 = vmul.u32 %v584, %v586
    %v589 = vmul.u32 %v584, %v587
    %v590 = vmul.u32 %v585, %v586
    %v591 = vmul.u32 %v585, %v587
    %v592 = vshll.u32 %v589, 16
    %v593 = vshrl.u32 %v589, 16
    %v594 = vshll.u32 %v590, 16
    %v595 = vshrl.u32 %v590, 16
    %vm596 = vc.u32 %v588, %v592
    %v597 = vsel %vm596, 1, 0
    %v598 = vadd.s32 %v588, %v592
    %v599 = vadd.s32 %v591, %v597
    %vm600 = vc.u32 %v598, %v594
    %v601 = vsel %vm600, 1, 0
    %v602 = vadd.s32 %v598, %v594
    %v603 = vadd.s32 %v599, %v601
    %v604 = vadd.s32 %v603, %v593
    %v605 = vadd.s32 %v604, %v595
    %v606 = vmul.u32 %v561, %v552
    %v607 = vadd.s32 %v583, %v602
    %vm608 = vc.u32 %v583, %v602
    %v609 = vadd.s32 %v605, 1
    %v610 = vsel %vm608, %v609, %v605
    %v611 = vadd.s32 %v606, %v610
    %v612 = vadd.s32 %v611, 536870912
    %v613 = vshrl.u32 %v612, 30
    %v614 = vshll.u32 %v613, 30
    %v615 = vsub.s32 %v611, %v614
    %vm616 = vcmp.lt.s32.totalorder %v615, 0
    %v617 = vsub.s32 0, %v615
    %v618 = vsel %vm616, %v617, %v615
    %v619 = vclz %v618
    %v620 = vsub.s32 %v619, 2
    %vm621 = vcmp.gt.s32.totalorder 0, %v620
    %v622 = vsel %vm621, 0, %v620
    %v623 = vsub.s32 32, %v622
    %v624 = vshll.u32 %v615, %v622
    %v625 = vshrl.u32 %v607, %v623
    %v626 = vor.u32 %v624, %v625
    %v627 = vsub.s32 4294967266, %v622
    %v628 = vadd.s32 %v627, 127
    %v629 = vshll.u32 %v628, 23
    %v630 = vor.u32 4788187, %v629
    %v631 = vand.u32 2147483647, %v630
    %v633 = vcvt.s32.f32 %v626
    %v634 = vmul.f32 %v633, %v631
    %v635 = vxor.u32 %v634, 2147483648
    %v636 = vsel %vm515, %v635, %v634
    %v637 = vsub.s32 4, %v613
    %v638 = vsel %vm515, %v637, %v613
    %v639 = vsel %vm514, %v43, %v636
    %v640 = vsel %vm514, 0, %v638
    %v641 = vmul.f32 %v639, %v639
    %v642 = vmul.f32 %v641, -0.001358992
    %v643 = vadd.f32 %v642, 0.041655596
    %v644 = vmul.f32 %v641, %v643
    %v645 = vadd.f32 %v644, -0.4999988
    %v646 = vmul.f32 %v641, %v645
    %v647 = vadd.f32 1.0, %v646
    %v648 = vmul.f32 %v639, %v639
    %v649 = vmul.f32 %v648, -0.00019511016
    %v650 = vadd.f32 %v649, 0.008332121
    %v651 = vmul.f32 %v648, %v650
    %v652 = vadd.f32 %v651, -0.16666654
    %v653 = vmul.f32 %v648, %v652
    %v654 = vadd.f32 %v653, 1.0
    %v655 = vmul.f32 %v654, %v639
    %vm656 = vweird.f32 %v43
    %v657 = vadd.s32 %v640, 3
    %v658 = vand.u32 %v657, 3
    %vm659 = vcmp.lt.s32.totalorder %v658, 2
    %vm660 = vcmp.eq.s32.totalorder %v658, 0
    %v661 = vxor.u32 %v655, 2147483648
    %v662 = vsel %vm660, %v647, %v661
    %vm663 = vcmp.eq.s32.totalorder %v658, 2
    %v664 = vxor.u32 %v647, 2147483648
    %v665 = vsel %vm663, %v664, %v655
    %v666 = vsel %vm659, %v662, %v665
    %v667 = vsel %vm656, nan, %v666
    %v668 = vand.u32 2147483647, %v40
    %vm669 = vcmp.le.f32.partialorder %v668, 0.7853982
    %vm670 = vcmp.lt.s32.totalorder %v40, 0
    %v671 = vand.u32 %v40, 2139095040
    %v672 = vshrl.u32 %v671, 23
    %v673 = vsub.s32 %v672, 127
    %v674 = vand.u32 2147483647, %v40
    %v675 = vand.u32 %v674, 8388607
    %v676 = vor.u32 %v675, 8388608
    %v677 = vsub.s32 0, %v676
    %v678 = vadd.s32 %v673, 1
    %vm679 = vcmp.gt.s32.totalorder %v678, 0
    %v680 = vsel %vm679, %v678, 0
    %v681 = vshrl.u32 %v680, 5
    %v682 = vand.u32 %v680, 31
    %v683 = vsub.s32 32, %v682
    %v684 = vshrl.u32 683565275, %v683
    %v685 = vshll.u32 683565275, %v682
    %v686 = vshrl.u32 2475754826, %v683
    %v687 = vor.u32 %v685, %v686
    %v688 = vshll.u32 2475754826, %v682
    %v689 = vshrl.u32 2131351028, %v683
    %v690 = vor.u32 %v688, %v689
    %v691 = vshll.u32 2131351028, %v682
    %v692 = vshrl.u32 2102212464, %v683
    %v693 = vor.u32 %v691, %v692
    %v694 = vshll.u32 2102212464, %v682
    %v695 = vshrl.u32 920167782, %v683
    %v696 = vor.u32 %v694, %v695
    %v697 = vshll.u32 920167782, %v682
    %v698 = vshrl.u32 1326507024, %v683
    %v699 = vor.u32 %v697, %v698
    %vm700 = vcmp.lt.s32.totalorder %v681, 1
    %vm701 = vcmp.lt.s32.totalorder %v681, 2
    %vm702 = vcmp.lt.s32.totalorder %v681, 3
    %vm703 = vcmp.lt.s32.totalorder %v681, 4
    %v704 = vsel %vm700, %v684, %v687
    %v705 = vsel %vm703, %v693, 2102212464
    %v706 = vsel %vm702, %v690, %v705
    %v707 = vsel %vm701, %v704, %v706
    %v708 = vsel %vm700, %v687, %v690
    %v709 = vsel %vm703, %v696, 920167782
    %v710 = vsel %vm702, %v693, %v709
    %v711 = vsel %vm701, %v708, %v710
    %v712 = vsel %vm700, %v690, %v693
    %v713 = vsel %vm703, %v699, 1326507024
    %v714 = vsel %vm702, %v696, %v713
    %v715 = vsel %vm701, %v712, %v714
    %v716 = vshll.u32 %v676, 8
    %v717 = vand.u32 %v716, 65535
    %v718 = vshrl.u32 %v716, 16
    %v719 = vand.u32 %v715, 65535
    %v720 = vshrl.u32 %v715, 16
    %v721 = vmul.u32 %v717, %v719
    %v722 = vmul.u32 %v717, %v720
    %v723 = vmul.u32 %v718, %v719
    %v724 = vmul.u32 %v718, %v720
    %v725 = vshll.u32 %v722, 16
    %v726 = vshrl.u32 %v722, 16
    %v727 = vshll.u32 %v723, 16
    %v728 = vshrl.u32 %v723, 16
    %vm729 = vc.u32 %v721, %v725
    %v730 = vsel %vm729, 1, 0
    %v731 = vadd.s32 %v721, %v725
    %v732 = vadd.s32 %v724, %v730
    %vm733 = vc.u32 %v731, %v727
    %v734 = vsel %vm733, 1, 0
    %v735 = vadd.s32 %v731, %v727
    %v736 = vadd.s32 %v732, %v734
    %v737 = vadd.s32 %v736, %v726
    %v738 = vadd.s32 %v737, %v728
    %v739 = vand.u32 %v716, 65535
    %v740 = vshrl.u32 %v716, 16
    %v741 = vand.u32 %v711, 65535
    %v742 = vshrl.u32 %v711, 16
    %v743 = vmul.u32 %v739, %v741
    %v744 = vmul.u32 %v739, %v742
    %v745 = vmul.u32 %v740, %v741
    %v746 = vmul.u32 %v740, %v742
    %v747 = vshll.u32 %v744, 16
    %v748 = vshrl.u32 %v744, 16
    %v749 = vshll.u32 %v745, 16
    %v750 = vshrl.u32 %v745, 16
    %vm751 = vc.u32 %v743, %v747
    %v752 = vsel %vm751, 1, 0
    %v753 = vadd.s32 %v743, %v747
    %v754 = vadd.s32 %v746, %v752
    %vm755 = vc.u32 %v753, %v749
    %v756 = vsel %vm755, 1, 0
    %v757 = vadd.s32 %v753, %v749
    %v758 = vadd.s32 %v754, %v756
    %v759 = vadd.s32 %v758, %v748
    %v760 = vadd.s32 %v759, %v750
    %v761 = vmul.u32 %v716, %v707
    %v762 = vadd.s32 %v738, %v757
    %vm763 = vc.u32 %v738, %v757
    %v764 = vadd.s32 %v760, 1
    %v765 = vsel %vm763, %v764, %v760
    %v766 = vadd.s32 %v761, %v765
    %v767 = vadd.s32 %v766, 536870912
    %v768 = vshrl.u32 %v767, 30
    %v769 = vshll.u32 %v768, 30
    %v770 = vsub.s32 %v766, %v769
    %vm771 = vcmp.lt.s32.totalorder %v770, 0
    %v772 = vsub.s32 0, %v770
    %v773 = vsel %vm771, %v772, %v770
    %v774 = vclz %v773
    %v775 = vsub.s32 %v774, 2
    %vm776 = vcmp.gt.s32.totalorder 0, %v775
    %v777 = vsel %vm776, 0, %v775
    %v778 = vsub.s32 32, %v777
    %v779 = vshll.u32 %v770, %v777
    %v780 = vshrl.u32 %v762, %v778
    %v781 = vor.u32 %v779, %v780
    %v782 = vsub.s32 4294967266, %v777
    %v783 = vadd.s32 %v782, 127
    %v784 = vshll.u32 %v783, 23
    %v785 = vor.u32 4788187, %v784
    %v786 = vand.u32 2147483647, %v785
    %v788 = vcvt.s32.f32 %v781
    %v789 = vmul.f32 %v788, %v786
    %v790 = vxor.u32 %v789, 2147483648
    %v791 = vsel %vm670, %v790, %v789
    %v792 = vsub.s32 4, %v768
    %v793 = vsel %vm670, %v792, %v768
    %v794 = vsel %vm669, %v40, %v791
    %v795 = vsel %vm669, 0, %v793
    %v796 = vmul.f32 %v794, %v794
    %v797 = vmul.f32 %v796, -0.001358992
    %v798 = vadd.f32 %v797, 0.041655596
    %v799 = vmul.f32 %v796, %v798
    %v800 = vadd.f32 %v799, -0.4999988
    %v801 = vmul.f32 %v796, %v800
    %v802 = vadd.f32 1.0, %v801
    %v803 = vmul.f32 %v794, %v794
    %v804 = vmul.f32 %v803, -0.00019511016
    %v805 = vadd.f32 %v804, 0.008332121
    %v806 = vmul.f32 %v803, %v805
    %v807 = vadd.f32 %v806, -0.16666654
    %v808 = vmul.f32 %v803, %v807
    %v809 = vadd.f32 %v808, 1.0
    %v810 = vmul.f32 %v809, %v794
    %vm811 = vweird.f32 %v40
    %v812 = vand.u32 %v795, 3
    %vm813 = vcmp.lt.s32.totalorder %v812, 2
    %vm814 = vcmp.eq.s32.totalorder %v812, 0
    %v815 = vxor.u32 %v810, 2147483648
    %v816 = vsel %vm814, %v802, %v815
    %vm817 = vcmp.eq.s32.totalorder %v812, 2
    %v818 = vxor.u32 %v802, 2147483648
    %v819 = vsel %vm817, %v818, %v810
    %v820 = vsel %vm813, %v816, %v819
    %v821 = vsel %vm811, nan, %v820
    %v822 = vand.u32 2147483647, %v41
    %vm823 = vcmp.le.f32.partialorder %v822, 0.7853982
    %vm824 = vcmp.lt.s32.totalorder %v41, 0
    %v825 = vand.u32 %v41, 2139095040
    %v826 = vshrl.u32 %v825, 23
    %v827 = vsub.s32 %v826, 127
    %v828 = vand.u32 2147483647, %v41
    %v829 = vand.u32 %v828, 8388607
    %v830 = vor.u32 %v829, 8388608
    %v831 = vsub.s32 0, %v830
    %v832 = vadd.s32 %v827, 1
    %vm833 = vcmp.gt.s32.totalorder %v832, 0
    %v834 = vsel %vm833, %v832, 0
    %v835 = vshrl.u32 %v834, 5
    %v836 = vand.u32 %v834, 31
    %v837 = vsub.s32 32, %v836
    %v838 = vshrl.u32 683565275, %v837
    %v839 = vshll.u32 683565275, %v836
    %v840 = vshrl.u32 2475754826, %v837
    %v841 = vor.u32 %v839, %v840
    %v842 = vshll.u32 2475754826, %v836
    %v843 = vshrl.u32 2131351028, %v837
    %v844 = vor.u32 %v842, %v843
    %v845 = vshll.u32 2131351028, %v836
    %v846 = vshrl.u32 2102212464, %v837
    %v847 = vor.u32 %v845, %v846
    %v848 = vshll.u32 2102212464, %v836
    %v849 = vshrl.u32 920167782, %v837
    %v850 = vor.u32 %v848, %v849
    %v851 = vshll.u32 920167782, %v836
    %v852 = vshrl.u32 1326507024, %v837
    %v853 = vor.u32 %v851, %v852
    %vm854 = vcmp.lt.s32.totalorder %v835, 1
    %vm855 = vcmp.lt.s32.totalorder %v835, 2
    %vm856 = vcmp.lt.s32.totalorder %v835, 3
    %vm857 = vcmp.lt.s32.totalorder %v835, 4
    %v858 = vsel %vm854, %v838, %v841
    %v859 = vsel %vm857, %v847, 2102212464
    %v860 = vsel %vm856, %v844, %v859
    %v861 = vsel %vm855, %v858, %v860
    %v862 = vsel %vm854, %v841, %v844
    %v863 = vsel %vm857, %v850, 920167782
    %v864 = vsel %vm856, %v847, %v863
    %v865 = vsel %vm855, %v862, %v864
    %v866 = vsel %vm854, %v844, %v847
    %v867 = vsel %vm857, %v853, 1326507024
    %v868 = vsel %vm856, %v850, %v867
    %v869 = vsel %vm855, %v866, %v868
    %v870 = vshll.u32 %v830, 8
    %v871 = vand.u32 %v870, 65535
    %v872 = vshrl.u32 %v870, 16
    %v873 = vand.u32 %v869, 65535
    %v874 = vshrl.u32 %v869, 16
    %v875 = vmul.u32 %v871, %v873
    %v876 = vmul.u32 %v871, %v874
    %v877 = vmul.u32 %v872, %v873
    %v878 = vmul.u32 %v872, %v874
    %v879 = vshll.u32 %v876, 16
    %v880 = vshrl.u32 %v876, 16
    %v881 = vshll.u32 %v877, 16
    %v882 = vshrl.u32 %v877, 16
    %vm883 = vc.u32 %v875, %v879
    %v884 = vsel %vm883, 1, 0
    %v885 = vadd.s32 %v875, %v879
    %v886 = vadd.s32 %v878, %v884
    %vm887 = vc.u32 %v885, %v881
    %v888 = vsel %vm887, 1, 0
    %v889 = vadd.s32 %v885, %v881
    %v890 = vadd.s32 %v886, %v888
    %v891 = vadd.s32 %v890, %v880
    %v892 = vadd.s32 %v891, %v882
    %v893 = vand.u32 %v870, 65535
    %v894 = vshrl.u32 %v870, 16
    %v895 = vand.u32 %v865, 65535
    %v896 = vshrl.u32 %v865, 16
    %v897 = vmul.u32 %v893, %v895
    %v898 = vmul.u32 %v893, %v896
    %v899 = vmul.u32 %v894, %v895
    %v900 = vmul.u32 %v894, %v896
    %v901 = vshll.u32 %v898, 16
    %v902 = vshrl.u32 %v898, 16
    %v903 = vshll.u32 %v899, 16
    %v904 = vshrl.u32 %v899, 16
    %vm905 = vc.u32 %v897, %v901
    %v906 = vsel %vm905, 1, 0
    %v907 = vadd.s32 %v897, %v901
    %v908 = vadd.s32 %v900, %v906
    %vm909 = vc.u32 %v907, %v903
    %v910 = vsel %vm909, 1, 0
    %v911 = vadd.s32 %v907, %v903
    %v912 = vadd.s32 %v908, %v910
    %v913 = vadd.s32 %v912, %v902
    %v914 = vadd.s32 %v913, %v904
    %v915 = vmul.u32 %v870, %v861
    %v916 = vadd.s32 %v892, %v911
    %vm917 = vc.u32 %v892, %v911
    %v918 = vadd.s32 %v914, 1
    %v919 = vsel %vm917, %v918, %v914
    %v920 = vadd.s32 %v915, %v919
    %v921 = vadd.s32 %v920, 536870912
    %v922 = vshrl.u32 %v921, 30
    %v923 = vshll.u32 %v922, 30
    %v924 = vsub.s32 %v920, %v923
    %vm925 = vcmp.lt.s32.totalorder %v924, 0
    %v926 = vsub.s32 0, %v924
    %v927 = vsel %vm925, %v926, %v924
    %v928 = vclz %v927
    %v929 = vsub.s32 %v928, 2
    %vm930 = vcmp.gt.s32.totalorder 0, %v929
    %v931 = vsel %vm930, 0, %v929
    %v932 = vsub.s32 32, %v931
    %v933 = vshll.u32 %v924, %v931
    %v934 = vshrl.u32 %v916, %v932
    %v935 = vor.u32 %v933, %v934
    %v936 = vsub.s32 4294967266, %v931
    %v937 = vadd.s32 %v936, 127
    %v938 = vshll.u32 %v937, 23
    %v939 = vor.u32 4788187, %v938
    %v940 = vand.u32 2147483647, %v939
    %v942 = vcvt.s32.f32 %v935
    %v943 = vmul.f32 %v942, %v940
    %v944 = vxor.u32 %v943, 2147483648
    %v945 = vsel %vm824, %v944, %v943
    %v946 = vsub.s32 4, %v922
    %v947 = vsel %vm824, %v946, %v922
    %v948 = vsel %vm823, %v41, %v945
    %v949 = vsel %vm823, 0, %v947
    %v950 = vmul.f32 %v948, %v948
    %v951 = vmul.f32 %v950, -0.001358992
    %v952 = vadd.f32 %v951, 0.041655596
    %v953 = vmul.f32 %v950, %v952
    %v954 = vadd.f32 %v953, -0.4999988
    %v955 = vmul.f32 %v950, %v954
    %v956 = vadd.f32 1.0, %v955
    %v957 = vmul.f32 %v948, %v948
    %v958 = vmul.f32 %v957, -0.00019511016
    %v959 = vadd.f32 %v958, 0.008332121
    %v960 = vmul.f32 %v957, %v959
    %v961 = vadd.f32 %v960, -0.16666654
    %v962 = vmul.f32 %v957, %v961
    %v963 = vadd.f32 %v962, 1.0
    %v964 = vmul.f32 %v963, %v948
    %vm965 = vweird.f32 %v41
    %v966 = vand.u32 %v949, 3
    %vm967 = vcmp.lt.s32.totalorder %v966, 2
    %vm968 = vcmp.eq.s32.totalorder %v966, 0
    %v969 = vxor.u32 %v964, 2147483648
    %v970 = vsel %vm968, %v956, %v969
    %vm971 = vcmp.eq.s32.totalorder %v966, 2
    %v972 = vxor.u32 %v956, 2147483648
    %v973 = vsel %vm971, %v972, %v964
    %v974 = vsel %vm967, %v970, %v973
    %v975 = vsel %vm965, nan, %v974
    %v976 = vand.u32 2147483647, %v42
    %vm977 = vcmp.le.f32.partialorder %v976, 0.7853982
    %vm978 = vcmp.lt.s32.totalorder %v42, 0
    %v979 = vand.u32 %v42, 2139095040
    %v980 = vshrl.u32 %v979, 23
    %v981 = vsub.s32 %v980, 127
    %v982 = vand.u32 2147483647, %v42
    %v983 = vand.u32 %v982, 8388607
    %v984 = vor.u32 %v983, 8388608
    %v985 = vsub.s32 0, %v984
    %v986 = vadd.s32 %v981, 1
    %vm987 = vcmp.gt.s32.totalorder %v986, 0
    %v988 = vsel %vm987, %v986, 0
    %v989 = vshrl.u32 %v988, 5
    %v990 = vand.u32 %v988, 31
    %v991 = vsub.s32 32, %v990
    %v992 = vshrl.u32 683565275, %v991
    %v993 = vshll.u32 683565275, %v990
    %v994 = vshrl.u32 2475754826, %v991
    %v995 = vor.u32 %v993, %v994
    %v996 = vshll.u32 2475754826, %v990
    %v997 = vshrl.u32 2131351028, %v991
    %v998 = vor.u32 %v996, %v997
    %v999 = vshll.u32 2131351028, %v990
    %v1000 = vshrl.u32 2102212464, %v991
    %v1001 = vor.u32 %v999, %v1000
    %v1002 = vshll.u32 2102212464, %v990
    %v1003 = vshrl.u32 920167782, %v991
    %v1004 = vor.u32 %v1002, %v1003
    %v1005 = vshll.u32 920167782, %v990
    %v1006 = vshrl.u32 1326507024, %v991
    %v1007 = vor.u32 %v1005, %v1006
    %vm1008 = vcmp.lt.s32.totalorder %v989, 1
    %vm1009 = vcmp.lt.s32.totalorder %v989, 2
    %vm1010 = vcmp.lt.s32.totalorder %v989, 3
    %vm1011 = vcmp.lt.s32.totalorder %v989, 4
    %v1012 = vsel %vm1008, %v992, %v995
    %v1013 = vsel %vm1011, %v1001, 2102212464
    %v1014 = vsel %vm1010, %v998, %v1013
    %v1015 = vsel %vm1009, %v1012, %v1014
    %v1016 = vsel %vm1008, %v995, %v998
    %v1017 = vsel %vm1011, %v1004, 920167782
    %v1018 = vsel %vm1010, %v1001, %v1017
    %v1019 = vsel %vm1009, %v1016, %v1018
    %v1020 = vsel %vm1008, %v998, %v1001
    %v1021 = vsel %vm1011, %v1007, 1326507024
    %v1022 = vsel %vm1010, %v1004, %v1021
    %v1023 = vsel %vm1009, %v1020, %v1022
    %v1024 = vshll.u32 %v984, 8
    %v1025 = vand.u32 %v1024, 65535
    %v1026 = vshrl.u32 %v1024, 16
    %v1027 = vand.u32 %v1023, 65535
    %v1028 = vshrl.u32 %v1023, 16
    %v1029 = vmul.u32 %v1025, %v1027
    %v1030 = vmul.u32 %v1025, %v1028
    %v1031 = vmul.u32 %v1026, %v1027
    %v1032 = vmul.u32 %v1026, %v1028
    %v1033 = vshll.u32 %v1030, 16
    %v1034 = vshrl.u32 %v1030, 16
    %v1035 = vshll.u32 %v1031, 16
    %v1036 = vshrl.u32 %v1031, 16
    %vm1037 = vc.u32 %v1029, %v1033
    %v1038 = vsel %vm1037, 1, 0
    %v1039 = vadd.s32 %v1029, %v1033
    %v1040 = vadd.s32 %v1032, %v1038
    %vm1041 = vc.u32 %v1039, %v1035
    %v1042 = vsel %vm1041, 1, 0
    %v1043 = vadd.s32 %v1039, %v1035
    %v1044 = vadd.s32 %v1040, %v1042
    %v1045 = vadd.s32 %v1044, %v1034
    %v1046 = vadd.s32 %v1045, %v1036
    %v1047 = vand.u32 %v1024, 65535
    %v1048 = vshrl.u32 %v1024, 16
    %v1049 = vand.u32 %v1019, 65535
    %v1050 = vshrl.u32 %v1019, 16
    %v1051 = vmul.u32 %v1047, %v1049
    %v1052 = vmul.u32 %v1047, %v1050
    %v1053 = vmul.u32 %v1048, %v1049
    %v1054 = vmul.u32 %v1048, %v1050
    %v1055 = vshll.u32 %v1052, 16
    %v1056 = vshrl.u32 %v1052, 16
    %v1057 = vshll.u32 %v1053, 16
    %v1058 = vshrl.u32 %v1053, 16
    %vm1059 = vc.u32 %v1051, %v1055
    %v1060 = vsel %vm1059, 1, 0
    %v1061 = vadd.s32 %v1051, %v1055
    %v1062 = vadd.s32 %v1054, %v1060
    %vm1063 = vc.u32 %v1061, %v1057
    %v1064 = vsel %vm1063, 1, 0
    %v1065 = vadd.s32 %v1061, %v1057
    %v1066 = vadd.s32 %v1062, %v1064
    %v1067 = vadd.s32 %v1066, %v1056
    %v1068 = vadd.s32 %v1067, %v1058
    %v1069 = vmul.u32 %v1024, %v1015
    %v1070 = vadd.s32 %v1046, %v1065
    %vm1071 = vc.u32 %v1046, %v1065
    %v1072 = vadd.s32 %v1068, 1
    %v1073 = vsel %vm1071, %v1072, %v1068
    %v1074 = vadd.s32 %v1069, %v1073
    %v1075 = vadd.s32 %v1074, 536870912
    %v1076 = vshrl.u32 %v1075, 30
    %v1077 = vshll.u32 %v1076, 30
    %v1078 = vsub.s32 %v1074, %v1077
    %vm1079 = vcmp.lt.s32.totalorder %v1078, 0
    %v1080 = vsub.s32 0, %v1078
    %v1081 = vsel %vm1079, %v1080, %v1078
    %v1082 = vclz %v1081
    %v1083 = vsub.s32 %v1082, 2
    %vm1084 = vcmp.gt.s32.totalorder 0, %v1083
    %v1085 = vsel %vm1084, 0, %v1083
    %v1086 = vsub.s32 32, %v1085
    %v1087 = vshll.u32 %v1078, %v1085
    %v1088 = vshrl.u32 %v1070, %v1086
    %v1089 = vor.u32 %v1087, %v1088
    %v1090 = vsub.s32 4294967266, %v1085
    %v1091 = vadd.s32 %v1090, 127
    %v1092 = vshll.u32 %v1091, 23
    %v1093 = vor.u32 4788187, %v1092
    %v1094 = vand.u32 2147483647, %v1093
    %v1096 = vcvt.s32.f32 %v1089
    %v1097 = vmul.f32 %v1096, %v1094
    %v1098 = vxor.u32 %v1097, 2147483648
    %v1099 = vsel %vm978, %v1098, %v1097
    %v1100 = vsub.s32 4, %v1076
    %v1101 = vsel %vm978, %v1100, %v1076
    %v1102 = vsel %vm977, %v42, %v1099
    %v1103 = vsel %vm977, 0, %v1101
    %v1104 = vmul.f32 %v1102, %v1102
    %v1105 = vmul.f32 %v1104, -0.001358992
    %v1106 = vadd.f32 %v1105, 0.041655596
    %v1107 = vmul.f32 %v1104, %v1106
    %v1108 = vadd.f32 %v1107, -0.4999988
    %v1109 = vmul.f32 %v1104, %v1108
    %v1110 = vadd.f32 1.0, %v1109
    %v1111 = vmul.f32 %v1102, %v1102
    %v1112 = vmul.f32 %v1111, -0.00019511016
    %v1113 = vadd.f32 %v1112, 0.008332121
    %v1114 = vmul.f32 %v1111, %v1113
    %v1115 = vadd.f32 %v1114, -0.16666654
    %v1116 = vmul.f32 %v1111, %v1115
    %v1117 = vadd.f32 %v1116, 1.0
    %v1118 = vmul.f32 %v1117, %v1102
    %vm1119 = vweird.f32 %v42
    %v1120 = vand.u32 %v1103, 3
    %vm1121 = vcmp.lt.s32.totalorder %v1120, 2
    %vm1122 = vcmp.eq.s32.totalorder %v1120, 0
    %v1123 = vxor.u32 %v1118, 2147483648
    %v1124 = vsel %vm1122, %v1110, %v1123
    %vm1125 = vcmp.eq.s32.totalorder %v1120, 2
    %v1126 = vxor.u32 %v1110, 2147483648
    %v1127 = vsel %vm1125, %v1126, %v1118
    %v1128 = vsel %vm1121, %v1124, %v1127
    %v1129 = vsel %vm1119, nan, %v1128
    %v1130 = vand.u32 2147483647, %v43
    %vm1131 = vcmp.le.f32.partialorder %v1130, 0.7853982
    %vm1132 = vcmp.lt.s32.totalorder %v43, 0
    %v1133 = vand.u32 %v43, 2139095040
    %v1134 = vshrl.u32 %v1133, 23
    %v1135 = vsub.s32 %v1134, 127
    %v1136 = vand.u32 2147483647, %v43
    %v1137 = vand.u32 %v1136, 8388607
    %v1138 = vor.u32 %v1137, 8388608
    %v1139 = vsub.s32 0, %v1138
    %v1140 = vadd.s32 %v1135, 1
    %vm1141 = vcmp.gt.s32.totalorder %v1140, 0
    %v1142 = vsel %vm1141, %v1140, 0
    %v1143 = vshrl.u32 %v1142, 5
    %v1144 = vand.u32 %v1142, 31
    %v1145 = vsub.s32 32, %v1144
    %v1146 = vshrl.u32 683565275, %v1145
    %v1147 = vshll.u32 683565275, %v1144
    %v1148 = vshrl.u32 2475754826, %v1145
    %v1149 = vor.u32 %v1147, %v1148
    %v1150 = vshll.u32 2475754826, %v1144
    %v1151 = vshrl.u32 2131351028, %v1145
    %v1152 = vor.u32 %v1150, %v1151
    %v1153 = vshll.u32 2131351028, %v1144
    %v1154 = vshrl.u32 2102212464, %v1145
    %v1155 = vor.u32 %v1153, %v1154
    %v1156 = vshll.u32 2102212464, %v1144
    %v1157 = vshrl.u32 920167782, %v1145
    %v1158 = vor.u32 %v1156, %v1157
    %v1159 = vshll.u32 920167782, %v1144
    %v1160 = vshrl.u32 1326507024, %v1145
    %v1161 = vor.u32 %v1159, %v1160
    %vm1162 = vcmp.lt.s32.totalorder %v1143, 1
    %vm1163 = vcmp.lt.s32.totalorder %v1143, 2
    %vm1164 = vcmp.lt.s32.totalorder %v1143, 3
    %vm1165 = vcmp.lt.s32.totalorder %v1143, 4
    %v1166 = vsel %vm1162, %v1146, %v1149
    %v1167 = vsel %vm1165, %v1155, 2102212464
    %v1168 = vsel %vm1164, %v1152, %v1167
    %v1169 = vsel %vm1163, %v1166, %v1168
    %v1170 = vsel %vm1162, %v1149, %v1152
    %v1171 = vsel %vm1165, %v1158, 920167782
    %v1172 = vsel %vm1164, %v1155, %v1171
    %v1173 = vsel %vm1163, %v1170, %v1172
    %v1174 = vsel %vm1162, %v1152, %v1155
    %v1175 = vsel %vm1165, %v1161, 1326507024
    %v1176 = vsel %vm1164, %v1158, %v1175
    %v1177 = vsel %vm1163, %v1174, %v1176
    %v1178 = vshll.u32 %v1138, 8
    %v1179 = vand.u32 %v1178, 65535
    %v1180 = vshrl.u32 %v1178, 16
    %v1181 = vand.u32 %v1177, 65535
    %v1182 = vshrl.u32 %v1177, 16
    %v1183 = vmul.u32 %v1179, %v1181
    %v1184 = vmul.u32 %v1179, %v1182
    %v1185 = vmul.u32 %v1180, %v1181
    %v1186 = vmul.u32 %v1180, %v1182
    %v1187 = vshll.u32 %v1184, 16
    %v1188 = vshrl.u32 %v1184, 16
    %v1189 = vshll.u32 %v1185, 16
    %v1190 = vshrl.u32 %v1185, 16
    %vm1191 = vc.u32 %v1183, %v1187
    %v1192 = vsel %vm1191, 1, 0
    %v1193 = vadd.s32 %v1183, %v1187
    %v1194 = vadd.s32 %v1186, %v1192
    %vm1195 = vc.u32 %v1193, %v1189
    %v1196 = vsel %vm1195, 1, 0
    %v1197 = vadd.s32 %v1193, %v1189
    %v1198 = vadd.s32 %v1194, %v1196
    %v1199 = vadd.s32 %v1198, %v1188
    %v1200 = vadd.s32 %v1199, %v1190
    %v1201 = vand.u32 %v1178, 65535
    %v1202 = vshrl.u32 %v1178, 16
    %v1203 = vand.u32 %v1173, 65535
    %v1204 = vshrl.u32 %v1173, 16
    %v1205 = vmul.u32 %v1201, %v1203
    %v1206 = vmul.u32 %v1201, %v1204
    %v1207 = vmul.u32 %v1202, %v1203
    %v1208 = vmul.u32 %v1202, %v1204
    %v1209 = vshll.u32 %v1206, 16
    %v1210 = vshrl.u32 %v1206, 16
    %v1211 = vshll.u32 %v1207, 16
    %v1212 = vshrl.u32 %v1207, 16
    %vm1213 = vc.u32 %v1205, %v1209
    %v1214 = vsel %vm1213, 1, 0
    %v1215 = vadd.s32 %v1205, %v1209
    %v1216 = vadd.s32 %v1208, %v1214
    %vm1217 = vc.u32 %v1215, %v1211
    %v1218 = vsel %vm1217, 1, 0
    %v1219 = vadd.s32 %v1215, %v1211
    %v1220 = vadd.s32 %v1216, %v1218
    %v1221 = vadd.s32 %v1220, %v1210
    %v1222 = vadd.s32 %v1221, %v1212
    %v1223 = vmul.u32 %v1178, %v1169
    %v1224 = vadd.s32 %v1200, %v1219
    %vm1225 = vc.u32 %v1200, %v1219
    %v1226 = vadd.s32 %v1222, 1
    %v1227 = vsel %vm1225, %v1226, %v1222
    %v1228 = vadd.s32 %v1223, %v1227
    %v1229 = vadd.s32 %v1228, 536870912
    %v1230 = vshrl.u32 %v1229, 30
    %v1231 = vshll.u32 %v1230, 30
    %v1232 = vsub.s32 %v1228, %v1231
    %vm1233 = vcmp.lt.s32.totalorder %v1232, 0
    %v1234 = vsub.s32 0, %v1232
    %v1235 = vsel %vm1233, %v1234, %v1232
    %v1236 = vclz %v1235
    %v1237 = vsub.s32 %v1236, 2
    %vm1238 = vcmp.gt.s32.totalorder 0, %v1237
    %v1239 = vsel %vm1238, 0, %v1237
    %v1240 = vsub.s32 32, %v1239
    %v1241 = vshll.u32 %v1232, %v1239
    %v1242 = vshrl.u32 %v1224, %v1240
    %v1243 = vor.u32 %v1241, %v1242
    %v1244 = vsub.s32 4294967266, %v1239
    %v1245 = vadd.s32 %v1244, 127
    %v1246 = vshll.u32 %v1245, 23
    %v1247 = vor.u32 4788187, %v1246
    %v1248 = vand.u32 2147483647, %v1247
    %v1250 = vcvt.s32.f32 %v1243
    %v1251 = vmul.f32 %v1250, %v1248
    %v1252 = vxor.u32 %v1251, 2147483648
    %v1253 = vsel %vm1132, %v1252, %v1251
    %v1254 = vsub.s32 4, %v1230
    %v1255 = vsel %vm1132, %v1254, %v1230
    %v1256 = vsel %vm1131, %v43, %v1253
    %v1257 = vsel %vm1131, 0, %v1255
    %v1258 = vmul.f32 %v1256, %v1256
    %v1259 = vmul.f32 %v1258, -0.001358992
    %v1260 = vadd.f32 %v1259, 0.041655596
    %v1261 = vmul.f32 %v1258, %v1260
    %v1262 = vadd.f32 %v1261, -0.4999988
    %v1263 = vmul.f32 %v1258, %v1262
    %v1264 = vadd.f32 1.0, %v1263
    %v1265 = vmul.f32 %v1256, %v1256
    %v1266 = vmul.f32 %v1265, -0.00019511016
    %v1267 = vadd.f32 %v1266, 0.008332121
    %v1268 = vmul.f32 %v1265, %v1267
    %v1269 = vadd.f32 %v1268, -0.16666654
    %v1270 = vmul.f32 %v1265, %v1269
    %v1271 = vadd.f32 %v1270, 1.0
    %v1272 = vmul.f32 %v1271, %v1256
    %vm1273 = vweird.f32 %v43
    %v1274 = vand.u32 %v1257, 3
    %vm1275 = vcmp.lt.s32.totalorder %v1274, 2
    %vm1276 = vcmp.eq.s32.totalorder %v1274, 0
    %v1277 = vxor.u32 %v1272, 2147483648
    %v1278 = vsel %vm1276, %v1264, %v1277
    %vm1279 = vcmp.eq.s32.totalorder %v1274, 2
    %v1280 = vxor.u32 %v1264, 2147483648
    %v1281 = vsel %vm1279, %v1280, %v1272
    %v1282 = vsel %vm1275, %v1278, %v1281
    %v1283 = vsel %vm1273, nan, %v1282
    %v1284 = vsel %vm47, %v202, %v821
    %v1285 = vsel %vm47, %v357, %v975
    %v1286 = vsel %vm47, %v512, %v1129
    %v1287 = vsel %vm47, %v667, %v1283
    %vm1288 = vcmask 261120
    %1289 = vst.msk [vmem:[#allocation2] sm:$0xff] %vm1288, %v1284
    %1290 = vst.msk [vmem:[#allocation2 + $0x8] sm:$0xff] %vm1288, %v1285
    %1291 = vst.msk [vmem:[#allocation2 + $0x10] sm:$0xff] %vm1288, %v1286
    %1292 = vst.msk [vmem:[#allocation2 + $0x18] sm:$0xff] %vm1288, %v1287
    // Predicated region
    $region10: #{tpu_custom_call.1} parent=1 // pred_check
      _
    $region11: #{tpu_custom_call.1} parent=1 // pred_check_branch
      %1294 = sbr.rel (0) target = $region13
    $region12: #{tpu_custom_call.1} parent=1 // pred_region
      %1296 = vsyncadd [#allocation3], 0
      %s1297 = sshll.u32 [#allocation2], 4
      %s1298 = int_to_ptr.vmem [resolvable:$true] %s1297
      %s1299 = sshll.u32 %s2, 4
      %s1300 = int_to_ptr.hbm [resolvable:$true] %s1299
      %1305 = dma.vmem_to_hbm [thread:$0]  %s1298, 512, %s1300, [#allocation3], 128, 128, 8
    $region13: #{tpu_custom_call.1} parent=1 // pred_fallthru
      _
    // Predicated region
    $region14: #{tpu_custom_call.1} parent=1 // pred_check
      _
    $region15: #{tpu_custom_call.1} parent=1 // pred_check_branch
      %1307 = sbr.rel (0) target = $region17
    $region16: #{tpu_custom_call.1} parent=1 // pred_region
      %1309 = dma.done [#allocation3], 512
    $region17: #{tpu_custom_call.1} parent=1 // pred_fallthru
      _
    %1310 = vsyncpa [#allocation3], 1

</llo_original>
